<compile_context>
chip_gen: v6e
topology: v6e:2x2x1
jax: 0.10.0
libtpu: 0.0.40
codegen_flags: <defaults>
</compile_context>

<pallas_src>
import jax
import jax.numpy as jnp
from jax import lax
from jax.experimental import pallas as pl
from jax.experimental.pallas import tpu as pltpu

IN_FEATURES = 7
HIDDEN = 5
OUT_FEATURES = 1

DROP_P = 0.1
DROP_THRESHOLD = int(round(DROP_P * (1 << 32)))   # uint32 threshold: P(drop) = 0.1
INV_KEEP = 1.0 / (1.0 - DROP_P)

LANE = 128        # TPU lane width; batch rows live on (sublane, lane)
SUB_CHUNK = 16    # rows-of-128 per inner loop step  -> 2048 batch rows, fits in vregs
TILE_R = 256      # rows-of-128 per grid step        -> 32768 batch rows, ~0.9 MiB x tile

_GOLDEN = 0x9E3779B9


def _round_up(a, b):
    return (a + b - 1) // b * b


def _hash_u32(z):
    """murmur3-style finalizer: uint32 -> well-mixed uint32 (portable, VPU-only)."""
    z = z ^ (z >> 16)
    z = z * jnp.uint32(0x85EBCA6B)
    z = z ^ (z >> 13)
    z = z * jnp.uint32(0xC2B2AE35)
    z = z ^ (z >> 16)
    return z


def oa_classifier_kernel(seed_ref, w1_ref, b1_ref, w2_ref, b2_ref, x_ref, o_ref):
    tile_r = x_ref.shape[1]                          # static (block shape)
    n_chunks = tile_r // SUB_CHUNK
    base_row = pl.program_id(0) * (tile_r * LANE)    # first batch row of this tile
    seed_mix = seed_ref[0].astype(jnp.uint32) * jnp.uint32(_GOLDEN)

    # Hoist all 46 scalar weight/bias reads out of the inner loop (loop-invariant).
    w1 = [[w1_ref[j, k] for k in range(IN_FEATURES)] for j in range(HIDDEN)]
    b1 = [b1_ref[j] for j in range(HIDDEN)]
    w2 = [w2_ref[j] for j in range(HIDDEN)]
    b2 = b2_ref[0]

    def chunk_body(c, carry):
        off = pl.multiple_of(c * SUB_CHUNK, SUB_CHUNK)
        xs = x_ref[:, pl.ds(off, SUB_CHUNK), :]      # (7, SUB_CHUNK, 128) dense f32

        # Global batch-row id of every element in this chunk (for the dropout hash);
        # ids are globally unique, so every grid tile gets a different mask.
        srow = lax.broadcasted_iota(jnp.int32, (SUB_CHUNK, LANE), 0)
        lane = lax.broadcasted_iota(jnp.int32, (SUB_CHUNK, LANE), 1)
        row_id = base_row + (off + srow) * LANE + lane

        logits = None
        for j in range(HIDDEN):
            # ---- input_layer row j on the VPU: 7 broadcast multiply-adds ----
            acc = xs[0] * w1[j][0] + b1[j]
            for k in range(1, IN_FEATURES):
                acc = acc + xs[k] * w1[j][k]

            # ---- F.dropout(p=0.1), training=True (matches torch default) ----
            # integer-threshold compare on hashed (row, feature) ids; inverted scaling
            z = _hash_u32((row_id * HIDDEN + j).astype(jnp.uint32) ^ seed_mix)
            acc = jnp.where(z >= jnp.uint32(DROP_THRESHOLD), acc * INV_KEEP, 0.0)

            # ---- relu (applied twice in the torch forward; idempotent -> once) ----
            acc = jnp.maximum(acc, 0.0)

            # ---- output_layer contribution (5 broadcast multiply-adds total) ----
            term = acc * w2[j]
            logits = term if logits is None else logits + term

        logits = logits + b2
        # sigmoid: exp goes to the EUP; the store is a dense (SUB_CHUNK, 128) slab.
        o_ref[0, pl.ds(off, SUB_CHUNK), :] = 1.0 / (1.0 + jnp.exp(-logits))
        return carry

    lax.fori_loop(0, n_chunks, chunk_body, 0)


def oa_classifier_forward(x, params, seed=0):
    """x: (N, 7) float32 -> (N, 1) float32 sigmoid probabilities."""
    n = x.shape[0]

    # Tile sizing: lane-dense slab layout, padded batch. Small batches shrink the tile
    # (min 2048 rows) so the demo doesn't over-pad; large batches use ~0.9 MiB tiles.
    tile_r = min(TILE_R, _round_up(pl.cdiv(n, LANE), SUB_CHUNK))
    n_pad = _round_up(n, tile_r * LANE)
    num_r = n_pad // LANE
    grid = (num_r // tile_r,)

    xp = jnp.pad(x.astype(jnp.float32), ((0, n_pad - n), (0, 0)))
    x_slab = xp.T.reshape(IN_FEATURES, num_r, LANE)   # (7, R, 128); transpose done by XLA

    w1 = params["w1"].astype(jnp.float32)                         # (5, 7)
    b1 = params["b1"].astype(jnp.float32)                         # (5,)
    w2 = params["w2"].reshape(HIDDEN).astype(jnp.float32)         # (5,)
    b2 = params["b2"].reshape(OUT_FEATURES).astype(jnp.float32)   # (1,)
    seed_arr = jnp.asarray([seed], dtype=jnp.int32)

    out_slab = pl.pallas_call(
        oa_classifier_kernel,
        out_shape=jax.ShapeDtypeStruct((1, num_r, LANE), jnp.float32),
        grid=grid,
        in_specs=[
            pl.BlockSpec(memory_space=pltpu.MemorySpace.SMEM),   # seed
            pl.BlockSpec(memory_space=pltpu.MemorySpace.SMEM),   # w1 (5,7)
            pl.BlockSpec(memory_space=pltpu.MemorySpace.SMEM),   # b1 (5,)
            pl.BlockSpec(memory_space=pltpu.MemorySpace.SMEM),   # w2 (5,)
            pl.BlockSpec(memory_space=pltpu.MemorySpace.SMEM),   # b2 (1,)
            pl.BlockSpec((IN_FEATURES, tile_r, LANE), lambda i: (0, i, 0)),  # x slab
        ],
        out_specs=pl.BlockSpec((1, tile_r, LANE), lambda i: (0, i, 0)),
        compiler_params=pltpu.CompilerParams(
            dimension_semantics=("parallel",),   # v7x: shard batch tiles across both TCs
        ),
    )(seed_arr, w1, b1, w2, b2, x_slab)

    return out_slab.reshape(n_pad)[:n].reshape(n, OUT_FEATURES)


def init_params(key):
    """Deterministic init matching nn.Linear shapes (Kaiming-uniform-ish)."""
    k1, k2, k3, k4 = jax.random.split(key, 4)
    lim1 = 1.0 / jnp.sqrt(IN_FEATURES)
    lim2 = 1.0 / jnp.sqrt(HIDDEN)
    return {
        "w1": jax.random.uniform(k1, (HIDDEN, IN_FEATURES), jnp.float32, -lim1, lim1),
        "b1": jax.random.uniform(k2, (HIDDEN,), jnp.float32, -lim1, lim1),
        "w2": jax.random.uniform(k3, (OUT_FEATURES, HIDDEN), jnp.float32, -lim2, lim2),
        "b2": jax.random.uniform(k4, (OUT_FEATURES,), jnp.float32, -lim2, lim2),
    }
    # TODO(synk): hidden_layer / hidden_layer2..4 are defined in __init__ but never
    # used in forward(), so they are intentionally not instantiated here.


if __name__ == "__main__":
    key = jax.random.PRNGKey(0)
    pkey, xkey = jax.random.split(key)
    params = init_params(pkey)

    batch = 8
    x = jax.random.normal(xkey, (batch, IN_FEATURES), dtype=jnp.float32)

    y = oa_classifier_forward(x, params, seed=0)
    jax.block_until_ready(y)

    assert y.shape == (batch, OUT_FEATURES)
    assert bool(jnp.all(jnp.isfinite(y)))
    assert bool(jnp.all((y >= 0.0) & (y <= 1.0)))
    print("KERNEL_OK")
</pallas_src>

<mosaic_0001>
module attributes {stable_mosaic.version = 11 : i64} {
  func.func @oa_classifier_kernel(%arg0: i32, %arg1: memref<1xi32, #tpu.memory_space<smem>>, %arg2: memref<5x7xf32, #tpu.memory_space<smem>>, %arg3: memref<5xf32, #tpu.memory_space<smem>>, %arg4: memref<5xf32, #tpu.memory_space<smem>>, %arg5: memref<1xf32, #tpu.memory_space<smem>>, %arg6: memref<7x16x128xf32, #tpu.memory_space<vmem>>, %arg7: memref<1x16x128xf32, #tpu.memory_space<vmem>>) attributes {dimension_semantics = [#tpu.dimension_semantics<parallel>], iteration_bounds = array<i64: 1>, scalar_prefetch = 0 : i64, scratch_operands = 0 : i64, tpu.core_type = #tpu.core_type<tc>, window_params = [{transform_indices = @transform_0, window_bounds = array<i64: 1>}, {transform_indices = @transform_1, window_bounds = array<i64: 5, 7>}, {transform_indices = @transform_2, window_bounds = array<i64: 5>}, {transform_indices = @transform_3, window_bounds = array<i64: 5>}, {transform_indices = @transform_4, window_bounds = array<i64: 1>}, {transform_indices = @transform_5, window_bounds = array<i64: 7, 16, 128>}, {transform_indices = @transform_6, window_bounds = array<i64: 1, 16, 128>}]} {
    %c2048_i32 = arith.constant 2048 : i32
    %0 = arith.muli %arg0, %c2048_i32 : i32
    %c0 = arith.constant 0 : index
    %1 = memref.load %arg1[%c0] : memref<1xi32, #tpu.memory_space<smem>>
    %c-1640531527_i32 = arith.constant -1640531527 : i32
    %2 = arith.muli %1, %c-1640531527_i32 : i32
    %c0_0 = arith.constant 0 : index
    %c0_1 = arith.constant 0 : index
    %3 = memref.load %arg2[%c0_0, %c0_1] : memref<5x7xf32, #tpu.memory_space<smem>>
    %c0_2 = arith.constant 0 : index
    %c1 = arith.constant 1 : index
    %4 = memref.load %arg2[%c0_2, %c1] : memref<5x7xf32, #tpu.memory_space<smem>>
    %c0_3 = arith.constant 0 : index
    %c2 = arith.constant 2 : index
    %5 = memref.load %arg2[%c0_3, %c2] : memref<5x7xf32, #tpu.memory_space<smem>>
    %c0_4 = arith.constant 0 : index
    %c3 = arith.constant 3 : index
    %6 = memref.load %arg2[%c0_4, %c3] : memref<5x7xf32, #tpu.memory_space<smem>>
    %c0_5 = arith.constant 0 : index
    %c4 = arith.constant 4 : index
    %7 = memref.load %arg2[%c0_5, %c4] : memref<5x7xf32, #tpu.memory_space<smem>>
    %c0_6 = arith.constant 0 : index
    %c5 = arith.constant 5 : index
    %8 = memref.load %arg2[%c0_6, %c5] : memref<5x7xf32, #tpu.memory_space<smem>>
    %c0_7 = arith.constant 0 : index
    %c6 = arith.constant 6 : index
    %9 = memref.load %arg2[%c0_7, %c6] : memref<5x7xf32, #tpu.memory_space<smem>>
    %c1_8 = arith.constant 1 : index
    %c0_9 = arith.constant 0 : index
    %10 = memref.load %arg2[%c1_8, %c0_9] : memref<5x7xf32, #tpu.memory_space<smem>>
    %c1_10 = arith.constant 1 : index
    %c1_11 = arith.constant 1 : index
    %11 = memref.load %arg2[%c1_10, %c1_11] : memref<5x7xf32, #tpu.memory_space<smem>>
    %c1_12 = arith.constant 1 : index
    %c2_13 = arith.constant 2 : index
    %12 = memref.load %arg2[%c1_12, %c2_13] : memref<5x7xf32, #tpu.memory_space<smem>>
    %c1_14 = arith.constant 1 : index
    %c3_15 = arith.constant 3 : index
    %13 = memref.load %arg2[%c1_14, %c3_15] : memref<5x7xf32, #tpu.memory_space<smem>>
    %c1_16 = arith.constant 1 : index
    %c4_17 = arith.constant 4 : index
    %14 = memref.load %arg2[%c1_16, %c4_17] : memref<5x7xf32, #tpu.memory_space<smem>>
    %c1_18 = arith.constant 1 : index
    %c5_19 = arith.constant 5 : index
    %15 = memref.load %arg2[%c1_18, %c5_19] : memref<5x7xf32, #tpu.memory_space<smem>>
    %c1_20 = arith.constant 1 : index
    %c6_21 = arith.constant 6 : index
    %16 = memref.load %arg2[%c1_20, %c6_21] : memref<5x7xf32, #tpu.memory_space<smem>>
    %c2_22 = arith.constant 2 : index
    %c0_23 = arith.constant 0 : index
    %17 = memref.load %arg2[%c2_22, %c0_23] : memref<5x7xf32, #tpu.memory_space<smem>>
    %c2_24 = arith.constant 2 : index
    %c1_25 = arith.constant 1 : index
    %18 = memref.load %arg2[%c2_24, %c1_25] : memref<5x7xf32, #tpu.memory_space<smem>>
    %c2_26 = arith.constant 2 : index
    %c2_27 = arith.constant 2 : index
    %19 = memref.load %arg2[%c2_26, %c2_27] : memref<5x7xf32, #tpu.memory_space<smem>>
    %c2_28 = arith.constant 2 : index
    %c3_29 = arith.constant 3 : index
    %20 = memref.load %arg2[%c2_28, %c3_29] : memref<5x7xf32, #tpu.memory_space<smem>>
    %c2_30 = arith.constant 2 : index
    %c4_31 = arith.constant 4 : index
    %21 = memref.load %arg2[%c2_30, %c4_31] : memref<5x7xf32, #tpu.memory_space<smem>>
    %c2_32 = arith.constant 2 : index
    %c5_33 = arith.constant 5 : index
    %22 = memref.load %arg2[%c2_32, %c5_33] : memref<5x7xf32, #tpu.memory_space<smem>>
    %c2_34 = arith.constant 2 : index
    %c6_35 = arith.constant 6 : index
    %23 = memref.load %arg2[%c2_34, %c6_35] : memref<5x7xf32, #tpu.memory_space<smem>>
    %c3_36 = arith.constant 3 : index
    %c0_37 = arith.constant 0 : index
    %24 = memref.load %arg2[%c3_36, %c0_37] : memref<5x7xf32, #tpu.memory_space<smem>>
    %c3_38 = arith.constant 3 : index
    %c1_39 = arith.constant 1 : index
    %25 = memref.load %arg2[%c3_38, %c1_39] : memref<5x7xf32, #tpu.memory_space<smem>>
    %c3_40 = arith.constant 3 : index
    %c2_41 = arith.constant 2 : index
    %26 = memref.load %arg2[%c3_40, %c2_41] : memref<5x7xf32, #tpu.memory_space<smem>>
    %c3_42 = arith.constant 3 : index
    %c3_43 = arith.constant 3 : index
    %27 = memref.load %arg2[%c3_42, %c3_43] : memref<5x7xf32, #tpu.memory_space<smem>>
    %c3_44 = arith.constant 3 : index
    %c4_45 = arith.constant 4 : index
    %28 = memref.load %arg2[%c3_44, %c4_45] : memref<5x7xf32, #tpu.memory_space<smem>>
    %c3_46 = arith.constant 3 : index
    %c5_47 = arith.constant 5 : index
    %29 = memref.load %arg2[%c3_46, %c5_47] : memref<5x7xf32, #tpu.memory_space<smem>>
    %c3_48 = arith.constant 3 : index
    %c6_49 = arith.constant 6 : index
    %30 = memref.load %arg2[%c3_48, %c6_49] : memref<5x7xf32, #tpu.memory_space<smem>>
    %c4_50 = arith.constant 4 : index
    %c0_51 = arith.constant 0 : index
    %31 = memref.load %arg2[%c4_50, %c0_51] : memref<5x7xf32, #tpu.memory_space<smem>>
    %c4_52 = arith.constant 4 : index
    %c1_53 = arith.constant 1 : index
    %32 = memref.load %arg2[%c4_52, %c1_53] : memref<5x7xf32, #tpu.memory_space<smem>>
    %c4_54 = arith.constant 4 : index
    %c2_55 = arith.constant 2 : index
    %33 = memref.load %arg2[%c4_54, %c2_55] : memref<5x7xf32, #tpu.memory_space<smem>>
    %c4_56 = arith.constant 4 : index
    %c3_57 = arith.constant 3 : index
    %34 = memref.load %arg2[%c4_56, %c3_57] : memref<5x7xf32, #tpu.memory_space<smem>>
    %c4_58 = arith.constant 4 : index
    %c4_59 = arith.constant 4 : index
    %35 = memref.load %arg2[%c4_58, %c4_59] : memref<5x7xf32, #tpu.memory_space<smem>>
    %c4_60 = arith.constant 4 : index
    %c5_61 = arith.constant 5 : index
    %36 = memref.load %arg2[%c4_60, %c5_61] : memref<5x7xf32, #tpu.memory_space<smem>>
    %c4_62 = arith.constant 4 : index
    %c6_63 = arith.constant 6 : index
    %37 = memref.load %arg2[%c4_62, %c6_63] : memref<5x7xf32, #tpu.memory_space<smem>>
    %c0_64 = arith.constant 0 : index
    %38 = memref.load %arg3[%c0_64] : memref<5xf32, #tpu.memory_space<smem>>
    %c1_65 = arith.constant 1 : index
    %39 = memref.load %arg3[%c1_65] : memref<5xf32, #tpu.memory_space<smem>>
    %c2_66 = arith.constant 2 : index
    %40 = memref.load %arg3[%c2_66] : memref<5xf32, #tpu.memory_space<smem>>
    %c3_67 = arith.constant 3 : index
    %41 = memref.load %arg3[%c3_67] : memref<5xf32, #tpu.memory_space<smem>>
    %c4_68 = arith.constant 4 : index
    %42 = memref.load %arg3[%c4_68] : memref<5xf32, #tpu.memory_space<smem>>
    %c0_69 = arith.constant 0 : index
    %43 = memref.load %arg4[%c0_69] : memref<5xf32, #tpu.memory_space<smem>>
    %c1_70 = arith.constant 1 : index
    %44 = memref.load %arg4[%c1_70] : memref<5xf32, #tpu.memory_space<smem>>
    %c2_71 = arith.constant 2 : index
    %45 = memref.load %arg4[%c2_71] : memref<5xf32, #tpu.memory_space<smem>>
    %c3_72 = arith.constant 3 : index
    %46 = memref.load %arg4[%c3_72] : memref<5xf32, #tpu.memory_space<smem>>
    %c4_73 = arith.constant 4 : index
    %47 = memref.load %arg4[%c4_73] : memref<5xf32, #tpu.memory_space<smem>>
    %c0_74 = arith.constant 0 : index
    %48 = memref.load %arg5[%c0_74] : memref<1xf32, #tpu.memory_space<smem>>
    %c0_i32 = arith.constant 0 : i32
    %c16_i32 = arith.constant 16 : i32
    %49 = arith.muli %c0_i32, %c16_i32 : i32
    %50 = tpu.assume_multiple %49, 16 : i32
    %c0_75 = arith.constant 0 : index
    %51 = arith.index_cast %50 : i32 to index
    %c0_76 = arith.constant 0 : index
    %52 = vector.load %arg6[%c0_75, %51, %c0_76] : memref<7x16x128xf32, #tpu.memory_space<vmem>>, vector<7x16x128xf32>
    %53 = tpu.iota {dimensions = array<i32: 0>} : vector<16x128xi32>
    %54 = tpu.iota {dimensions = array<i32: 1>} : vector<16x128xi32>
    %55 = vector.broadcast %50 : i32 to vector<16x128xi32>
    %56 = arith.addi %55, %53 : vector<16x128xi32>
    %c128_i32 = arith.constant 128 : i32
    %57 = vector.broadcast %c128_i32 : i32 to vector<16x128xi32>
    %58 = arith.muli %56, %57 : vector<16x128xi32>
    %59 = vector.broadcast %0 : i32 to vector<16x128xi32>
    %60 = arith.addi %59, %58 : vector<16x128xi32>
    %61 = arith.addi %60, %54 : vector<16x128xi32>
    %62 = vector.extract_strided_slice %52 {offsets = [0, 0, 0], sizes = [1, 16, 128], strides = [1, 1, 1]} : vector<7x16x128xf32> to vector<1x16x128xf32>
    %63 = vector.shape_cast %62 : vector<1x16x128xf32> to vector<16x128xf32>
    %64 = vector.broadcast %3 : f32 to vector<16x128xf32>
    %65 = arith.mulf %63, %64 : vector<16x128xf32>
    %66 = vector.broadcast %38 : f32 to vector<16x128xf32>
    %67 = arith.addf %65, %66 : vector<16x128xf32>
    %68 = vector.extract_strided_slice %52 {offsets = [1, 0, 0], sizes = [1, 16, 128], strides = [1, 1, 1]} : vector<7x16x128xf32> to vector<1x16x128xf32>
    %69 = vector.shape_cast %68 : vector<1x16x128xf32> to vector<16x128xf32>
    %70 = vector.broadcast %4 : f32 to vector<16x128xf32>
    %71 = arith.mulf %69, %70 : vector<16x128xf32>
    %72 = arith.addf %67, %71 : vector<16x128xf32>
    %73 = vector.extract_strided_slice %52 {offsets = [2, 0, 0], sizes = [1, 16, 128], strides = [1, 1, 1]} : vector<7x16x128xf32> to vector<1x16x128xf32>
    %74 = vector.shape_cast %73 : vector<1x16x128xf32> to vector<16x128xf32>
    %75 = vector.broadcast %5 : f32 to vector<16x128xf32>
    %76 = arith.mulf %74, %75 : vector<16x128xf32>
    %77 = arith.addf %72, %76 : vector<16x128xf32>
    %78 = vector.extract_strided_slice %52 {offsets = [3, 0, 0], sizes = [1, 16, 128], strides = [1, 1, 1]} : vector<7x16x128xf32> to vector<1x16x128xf32>
    %79 = vector.shape_cast %78 : vector<1x16x128xf32> to vector<16x128xf32>
    %80 = vector.broadcast %6 : f32 to vector<16x128xf32>
    %81 = arith.mulf %79, %80 : vector<16x128xf32>
    %82 = arith.addf %77, %81 : vector<16x128xf32>
    %83 = vector.extract_strided_slice %52 {offsets = [4, 0, 0], sizes = [1, 16, 128], strides = [1, 1, 1]} : vector<7x16x128xf32> to vector<1x16x128xf32>
    %84 = vector.shape_cast %83 : vector<1x16x128xf32> to vector<16x128xf32>
    %85 = vector.broadcast %7 : f32 to vector<16x128xf32>
    %86 = arith.mulf %84, %85 : vector<16x128xf32>
    %87 = arith.addf %82, %86 : vector<16x128xf32>
    %88 = vector.extract_strided_slice %52 {offsets = [5, 0, 0], sizes = [1, 16, 128], strides = [1, 1, 1]} : vector<7x16x128xf32> to vector<1x16x128xf32>
    %89 = vector.shape_cast %88 : vector<1x16x128xf32> to vector<16x128xf32>
    %90 = vector.broadcast %8 : f32 to vector<16x128xf32>
    %91 = arith.mulf %89, %90 : vector<16x128xf32>
    %92 = arith.addf %87, %91 : vector<16x128xf32>
    %93 = vector.extract_strided_slice %52 {offsets = [6, 0, 0], sizes = [1, 16, 128], strides = [1, 1, 1]} : vector<7x16x128xf32> to vector<1x16x128xf32>
    %94 = vector.shape_cast %93 : vector<1x16x128xf32> to vector<16x128xf32>
    %95 = vector.broadcast %9 : f32 to vector<16x128xf32>
    %96 = arith.mulf %94, %95 : vector<16x128xf32>
    %97 = arith.addf %92, %96 : vector<16x128xf32>
    %c5_i32 = arith.constant 5 : i32
    %98 = vector.broadcast %c5_i32 : i32 to vector<16x128xi32>
    %99 = arith.muli %61, %98 : vector<16x128xi32>
    %c0_i32_77 = arith.constant 0 : i32
    %100 = vector.broadcast %c0_i32_77 : i32 to vector<16x128xi32>
    %101 = arith.addi %99, %100 : vector<16x128xi32>
    %102 = vector.broadcast %2 : i32 to vector<16x128xi32>
    %103 = arith.xori %101, %102 : vector<16x128xi32>
    %c16_i32_78 = arith.constant 16 : i32
    %104 = vector.broadcast %c16_i32_78 : i32 to vector<16x128xi32>
    %105 = arith.shrui %103, %104 : vector<16x128xi32>
    %106 = arith.xori %103, %105 : vector<16x128xi32>
    %c-2048144789_i32 = arith.constant -2048144789 : i32
    %107 = vector.broadcast %c-2048144789_i32 : i32 to vector<16x128xi32>
    %108 = arith.muli %106, %107 : vector<16x128xi32>
    %c13_i32 = arith.constant 13 : i32
    %109 = vector.broadcast %c13_i32 : i32 to vector<16x128xi32>
    %110 = arith.shrui %108, %109 : vector<16x128xi32>
    %111 = arith.xori %108, %110 : vector<16x128xi32>
    %c-1028477387_i32 = arith.constant -1028477387 : i32
    %112 = vector.broadcast %c-1028477387_i32 : i32 to vector<16x128xi32>
    %113 = arith.muli %111, %112 : vector<16x128xi32>
    %c16_i32_79 = arith.constant 16 : i32
    %114 = vector.broadcast %c16_i32_79 : i32 to vector<16x128xi32>
    %115 = arith.shrui %113, %114 : vector<16x128xi32>
    %116 = arith.xori %113, %115 : vector<16x128xi32>
    %c429496730_i32 = arith.constant 429496730 : i32
    %117 = vector.broadcast %c429496730_i32 : i32 to vector<16x128xi32>
    %118 = arith.cmpi uge, %116, %117 : vector<16x128xi32>
    %cst = arith.constant 1.11111116 : f32
    %119 = vector.broadcast %cst : f32 to vector<16x128xf32>
    %120 = arith.mulf %97, %119 : vector<16x128xf32>
    %cst_80 = arith.constant 0.000000e+00 : f32
    %121 = vector.broadcast %cst_80 : f32 to vector<16x128xf32>
    %122 = arith.select %118, %120, %121 : vector<16x128xi1>, vector<16x128xf32>
    %cst_81 = arith.constant 0.000000e+00 : f32
    %123 = vector.broadcast %cst_81 : f32 to vector<16x128xf32>
    %124 = arith.maximumf %122, %123 : vector<16x128xf32>
    %125 = vector.broadcast %43 : f32 to vector<16x128xf32>
    %126 = arith.mulf %124, %125 : vector<16x128xf32>
    %127 = vector.extract_strided_slice %52 {offsets = [0, 0, 0], sizes = [1, 16, 128], strides = [1, 1, 1]} : vector<7x16x128xf32> to vector<1x16x128xf32>
    %128 = vector.shape_cast %127 : vector<1x16x128xf32> to vector<16x128xf32>
    %129 = vector.broadcast %10 : f32 to vector<16x128xf32>
    %130 = arith.mulf %128, %129 : vector<16x128xf32>
    %131 = vector.broadcast %39 : f32 to vector<16x128xf32>
    %132 = arith.addf %130, %131 : vector<16x128xf32>
    %133 = vector.extract_strided_slice %52 {offsets = [1, 0, 0], sizes = [1, 16, 128], strides = [1, 1, 1]} : vector<7x16x128xf32> to vector<1x16x128xf32>
    %134 = vector.shape_cast %133 : vector<1x16x128xf32> to vector<16x128xf32>
    %135 = vector.broadcast %11 : f32 to vector<16x128xf32>
    %136 = arith.mulf %134, %135 : vector<16x128xf32>
    %137 = arith.addf %132, %136 : vector<16x128xf32>
    %138 = vector.extract_strided_slice %52 {offsets = [2, 0, 0], sizes = [1, 16, 128], strides = [1, 1, 1]} : vector<7x16x128xf32> to vector<1x16x128xf32>
    %139 = vector.shape_cast %138 : vector<1x16x128xf32> to vector<16x128xf32>
    %140 = vector.broadcast %12 : f32 to vector<16x128xf32>
    %141 = arith.mulf %139, %140 : vector<16x128xf32>
    %142 = arith.addf %137, %141 : vector<16x128xf32>
    %143 = vector.extract_strided_slice %52 {offsets = [3, 0, 0], sizes = [1, 16, 128], strides = [1, 1, 1]} : vector<7x16x128xf32> to vector<1x16x128xf32>
    %144 = vector.shape_cast %143 : vector<1x16x128xf32> to vector<16x128xf32>
    %145 = vector.broadcast %13 : f32 to vector<16x128xf32>
    %146 = arith.mulf %144, %145 : vector<16x128xf32>
    %147 = arith.addf %142, %146 : vector<16x128xf32>
    %148 = vector.extract_strided_slice %52 {offsets = [4, 0, 0], sizes = [1, 16, 128], strides = [1, 1, 1]} : vector<7x16x128xf32> to vector<1x16x128xf32>
    %149 = vector.shape_cast %148 : vector<1x16x128xf32> to vector<16x128xf32>
    %150 = vector.broadcast %14 : f32 to vector<16x128xf32>
    %151 = arith.mulf %149, %150 : vector<16x128xf32>
    %152 = arith.addf %147, %151 : vector<16x128xf32>
    %153 = vector.extract_strided_slice %52 {offsets = [5, 0, 0], sizes = [1, 16, 128], strides = [1, 1, 1]} : vector<7x16x128xf32> to vector<1x16x128xf32>
    %154 = vector.shape_cast %153 : vector<1x16x128xf32> to vector<16x128xf32>
    %155 = vector.broadcast %15 : f32 to vector<16x128xf32>
    %156 = arith.mulf %154, %155 : vector<16x128xf32>
    %157 = arith.addf %152, %156 : vector<16x128xf32>
    %158 = vector.extract_strided_slice %52 {offsets = [6, 0, 0], sizes = [1, 16, 128], strides = [1, 1, 1]} : vector<7x16x128xf32> to vector<1x16x128xf32>
    %159 = vector.shape_cast %158 : vector<1x16x128xf32> to vector<16x128xf32>
    %160 = vector.broadcast %16 : f32 to vector<16x128xf32>
    %161 = arith.mulf %159, %160 : vector<16x128xf32>
    %162 = arith.addf %157, %161 : vector<16x128xf32>
    %c5_i32_82 = arith.constant 5 : i32
    %163 = vector.broadcast %c5_i32_82 : i32 to vector<16x128xi32>
    %164 = arith.muli %61, %163 : vector<16x128xi32>
    %c1_i32 = arith.constant 1 : i32
    %165 = vector.broadcast %c1_i32 : i32 to vector<16x128xi32>
    %166 = arith.addi %164, %165 : vector<16x128xi32>
    %167 = vector.broadcast %2 : i32 to vector<16x128xi32>
    %168 = arith.xori %166, %167 : vector<16x128xi32>
    %c16_i32_83 = arith.constant 16 : i32
    %169 = vector.broadcast %c16_i32_83 : i32 to vector<16x128xi32>
    %170 = arith.shrui %168, %169 : vector<16x128xi32>
    %171 = arith.xori %168, %170 : vector<16x128xi32>
    %c-2048144789_i32_84 = arith.constant -2048144789 : i32
    %172 = vector.broadcast %c-2048144789_i32_84 : i32 to vector<16x128xi32>
    %173 = arith.muli %171, %172 : vector<16x128xi32>
    %c13_i32_85 = arith.constant 13 : i32
    %174 = vector.broadcast %c13_i32_85 : i32 to vector<16x128xi32>
    %175 = arith.shrui %173, %174 : vector<16x128xi32>
    %176 = arith.xori %173, %175 : vector<16x128xi32>
    %c-1028477387_i32_86 = arith.constant -1028477387 : i32
    %177 = vector.broadcast %c-1028477387_i32_86 : i32 to vector<16x128xi32>
    %178 = arith.muli %176, %177 : vector<16x128xi32>
    %c16_i32_87 = arith.constant 16 : i32
    %179 = vector.broadcast %c16_i32_87 : i32 to vector<16x128xi32>
    %180 = arith.shrui %178, %179 : vector<16x128xi32>
    %181 = arith.xori %178, %180 : vector<16x128xi32>
    %c429496730_i32_88 = arith.constant 429496730 : i32
    %182 = vector.broadcast %c429496730_i32_88 : i32 to vector<16x128xi32>
    %183 = arith.cmpi uge, %181, %182 : vector<16x128xi32>
    %cst_89 = arith.constant 1.11111116 : f32
    %184 = vector.broadcast %cst_89 : f32 to vector<16x128xf32>
    %185 = arith.mulf %162, %184 : vector<16x128xf32>
    %cst_90 = arith.constant 0.000000e+00 : f32
    %186 = vector.broadcast %cst_90 : f32 to vector<16x128xf32>
    %187 = arith.select %183, %185, %186 : vector<16x128xi1>, vector<16x128xf32>
    %cst_91 = arith.constant 0.000000e+00 : f32
    %188 = vector.broadcast %cst_91 : f32 to vector<16x128xf32>
    %189 = arith.maximumf %187, %188 : vector<16x128xf32>
    %190 = vector.broadcast %44 : f32 to vector<16x128xf32>
    %191 = arith.mulf %189, %190 : vector<16x128xf32>
    %192 = arith.addf %126, %191 : vector<16x128xf32>
    %193 = vector.extract_strided_slice %52 {offsets = [0, 0, 0], sizes = [1, 16, 128], strides = [1, 1, 1]} : vector<7x16x128xf32> to vector<1x16x128xf32>
    %194 = vector.shape_cast %193 : vector<1x16x128xf32> to vector<16x128xf32>
    %195 = vector.broadcast %17 : f32 to vector<16x128xf32>
    %196 = arith.mulf %194, %195 : vector<16x128xf32>
    %197 = vector.broadcast %40 : f32 to vector<16x128xf32>
    %198 = arith.addf %196, %197 : vector<16x128xf32>
    %199 = vector.extract_strided_slice %52 {offsets = [1, 0, 0], sizes = [1, 16, 128], strides = [1, 1, 1]} : vector<7x16x128xf32> to vector<1x16x128xf32>
    %200 = vector.shape_cast %199 : vector<1x16x128xf32> to vector<16x128xf32>
    %201 = vector.broadcast %18 : f32 to vector<16x128xf32>
    %202 = arith.mulf %200, %201 : vector<16x128xf32>
    %203 = arith.addf %198, %202 : vector<16x128xf32>
    %204 = vector.extract_strided_slice %52 {offsets = [2, 0, 0], sizes = [1, 16, 128], strides = [1, 1, 1]} : vector<7x16x128xf32> to vector<1x16x128xf32>
    %205 = vector.shape_cast %204 : vector<1x16x128xf32> to vector<16x128xf32>
    %206 = vector.broadcast %19 : f32 to vector<16x128xf32>
    %207 = arith.mulf %205, %206 : vector<16x128xf32>
    %208 = arith.addf %203, %207 : vector<16x128xf32>
    %209 = vector.extract_strided_slice %52 {offsets = [3, 0, 0], sizes = [1, 16, 128], strides = [1, 1, 1]} : vector<7x16x128xf32> to vector<1x16x128xf32>
    %210 = vector.shape_cast %209 : vector<1x16x128xf32> to vector<16x128xf32>
    %211 = vector.broadcast %20 : f32 to vector<16x128xf32>
    %212 = arith.mulf %210, %211 : vector<16x128xf32>
    %213 = arith.addf %208, %212 : vector<16x128xf32>
    %214 = vector.extract_strided_slice %52 {offsets = [4, 0, 0], sizes = [1, 16, 128], strides = [1, 1, 1]} : vector<7x16x128xf32> to vector<1x16x128xf32>
    %215 = vector.shape_cast %214 : vector<1x16x128xf32> to vector<16x128xf32>
    %216 = vector.broadcast %21 : f32 to vector<16x128xf32>
    %217 = arith.mulf %215, %216 : vector<16x128xf32>
    %218 = arith.addf %213, %217 : vector<16x128xf32>
    %219 = vector.extract_strided_slice %52 {offsets = [5, 0, 0], sizes = [1, 16, 128], strides = [1, 1, 1]} : vector<7x16x128xf32> to vector<1x16x128xf32>
    %220 = vector.shape_cast %219 : vector<1x16x128xf32> to vector<16x128xf32>
    %221 = vector.broadcast %22 : f32 to vector<16x128xf32>
    %222 = arith.mulf %220, %221 : vector<16x128xf32>
    %223 = arith.addf %218, %222 : vector<16x128xf32>
    %224 = vector.extract_strided_slice %52 {offsets = [6, 0, 0], sizes = [1, 16, 128], strides = [1, 1, 1]} : vector<7x16x128xf32> to vector<1x16x128xf32>
    %225 = vector.shape_cast %224 : vector<1x16x128xf32> to vector<16x128xf32>
    %226 = vector.broadcast %23 : f32 to vector<16x128xf32>
    %227 = arith.mulf %225, %226 : vector<16x128xf32>
    %228 = arith.addf %223, %227 : vector<16x128xf32>
    %c5_i32_92 = arith.constant 5 : i32
    %229 = vector.broadcast %c5_i32_92 : i32 to vector<16x128xi32>
    %230 = arith.muli %61, %229 : vector<16x128xi32>
    %c2_i32 = arith.constant 2 : i32
    %231 = vector.broadcast %c2_i32 : i32 to vector<16x128xi32>
    %232 = arith.addi %230, %231 : vector<16x128xi32>
    %233 = vector.broadcast %2 : i32 to vector<16x128xi32>
    %234 = arith.xori %232, %233 : vector<16x128xi32>
    %c16_i32_93 = arith.constant 16 : i32
    %235 = vector.broadcast %c16_i32_93 : i32 to vector<16x128xi32>
    %236 = arith.shrui %234, %235 : vector<16x128xi32>
    %237 = arith.xori %234, %236 : vector<16x128xi32>
    %c-2048144789_i32_94 = arith.constant -2048144789 : i32
    %238 = vector.broadcast %c-2048144789_i32_94 : i32 to vector<16x128xi32>
    %239 = arith.muli %237, %238 : vector<16x128xi32>
    %c13_i32_95 = arith.constant 13 : i32
    %240 = vector.broadcast %c13_i32_95 : i32 to vector<16x128xi32>
    %241 = arith.shrui %239, %240 : vector<16x128xi32>
    %242 = arith.xori %239, %241 : vector<16x128xi32>
    %c-1028477387_i32_96 = arith.constant -1028477387 : i32
    %243 = vector.broadcast %c-1028477387_i32_96 : i32 to vector<16x128xi32>
    %244 = arith.muli %242, %243 : vector<16x128xi32>
    %c16_i32_97 = arith.constant 16 : i32
    %245 = vector.broadcast %c16_i32_97 : i32 to vector<16x128xi32>
    %246 = arith.shrui %244, %245 : vector<16x128xi32>
    %247 = arith.xori %244, %246 : vector<16x128xi32>
    %c429496730_i32_98 = arith.constant 429496730 : i32
    %248 = vector.broadcast %c429496730_i32_98 : i32 to vector<16x128xi32>
    %249 = arith.cmpi uge, %247, %248 : vector<16x128xi32>
    %cst_99 = arith.constant 1.11111116 : f32
    %250 = vector.broadcast %cst_99 : f32 to vector<16x128xf32>
    %251 = arith.mulf %228, %250 : vector<16x128xf32>
    %cst_100 = arith.constant 0.000000e+00 : f32
    %252 = vector.broadcast %cst_100 : f32 to vector<16x128xf32>
    %253 = arith.select %249, %251, %252 : vector<16x128xi1>, vector<16x128xf32>
    %cst_101 = arith.constant 0.000000e+00 : f32
    %254 = vector.broadcast %cst_101 : f32 to vector<16x128xf32>
    %255 = arith.maximumf %253, %254 : vector<16x128xf32>
    %256 = vector.broadcast %45 : f32 to vector<16x128xf32>
    %257 = arith.mulf %255, %256 : vector<16x128xf32>
    %258 = arith.addf %192, %257 : vector<16x128xf32>
    %259 = vector.extract_strided_slice %52 {offsets = [0, 0, 0], sizes = [1, 16, 128], strides = [1, 1, 1]} : vector<7x16x128xf32> to vector<1x16x128xf32>
    %260 = vector.shape_cast %259 : vector<1x16x128xf32> to vector<16x128xf32>
    %261 = vector.broadcast %24 : f32 to vector<16x128xf32>
    %262 = arith.mulf %260, %261 : vector<16x128xf32>
    %263 = vector.broadcast %41 : f32 to vector<16x128xf32>
    %264 = arith.addf %262, %263 : vector<16x128xf32>
    %265 = vector.extract_strided_slice %52 {offsets = [1, 0, 0], sizes = [1, 16, 128], strides = [1, 1, 1]} : vector<7x16x128xf32> to vector<1x16x128xf32>
    %266 = vector.shape_cast %265 : vector<1x16x128xf32> to vector<16x128xf32>
    %267 = vector.broadcast %25 : f32 to vector<16x128xf32>
    %268 = arith.mulf %266, %267 : vector<16x128xf32>
    %269 = arith.addf %264, %268 : vector<16x128xf32>
    %270 = vector.extract_strided_slice %52 {offsets = [2, 0, 0], sizes = [1, 16, 128], strides = [1, 1, 1]} : vector<7x16x128xf32> to vector<1x16x128xf32>
    %271 = vector.shape_cast %270 : vector<1x16x128xf32> to vector<16x128xf32>
    %272 = vector.broadcast %26 : f32 to vector<16x128xf32>
    %273 = arith.mulf %271, %272 : vector<16x128xf32>
    %274 = arith.addf %269, %273 : vector<16x128xf32>
    %275 = vector.extract_strided_slice %52 {offsets = [3, 0, 0], sizes = [1, 16, 128], strides = [1, 1, 1]} : vector<7x16x128xf32> to vector<1x16x128xf32>
    %276 = vector.shape_cast %275 : vector<1x16x128xf32> to vector<16x128xf32>
    %277 = vector.broadcast %27 : f32 to vector<16x128xf32>
    %278 = arith.mulf %276, %277 : vector<16x128xf32>
    %279 = arith.addf %274, %278 : vector<16x128xf32>
    %280 = vector.extract_strided_slice %52 {offsets = [4, 0, 0], sizes = [1, 16, 128], strides = [1, 1, 1]} : vector<7x16x128xf32> to vector<1x16x128xf32>
    %281 = vector.shape_cast %280 : vector<1x16x128xf32> to vector<16x128xf32>
    %282 = vector.broadcast %28 : f32 to vector<16x128xf32>
    %283 = arith.mulf %281, %282 : vector<16x128xf32>
    %284 = arith.addf %279, %283 : vector<16x128xf32>
    %285 = vector.extract_strided_slice %52 {offsets = [5, 0, 0], sizes = [1, 16, 128], strides = [1, 1, 1]} : vector<7x16x128xf32> to vector<1x16x128xf32>
    %286 = vector.shape_cast %285 : vector<1x16x128xf32> to vector<16x128xf32>
    %287 = vector.broadcast %29 : f32 to vector<16x128xf32>
    %288 = arith.mulf %286, %287 : vector<16x128xf32>
    %289 = arith.addf %284, %288 : vector<16x128xf32>
    %290 = vector.extract_strided_slice %52 {offsets = [6, 0, 0], sizes = [1, 16, 128], strides = [1, 1, 1]} : vector<7x16x128xf32> to vector<1x16x128xf32>
    %291 = vector.shape_cast %290 : vector<1x16x128xf32> to vector<16x128xf32>
    %292 = vector.broadcast %30 : f32 to vector<16x128xf32>
    %293 = arith.mulf %291, %292 : vector<16x128xf32>
    %294 = arith.addf %289, %293 : vector<16x128xf32>
    %c5_i32_102 = arith.constant 5 : i32
    %295 = vector.broadcast %c5_i32_102 : i32 to vector<16x128xi32>
    %296 = arith.muli %61, %295 : vector<16x128xi32>
    %c3_i32 = arith.constant 3 : i32
    %297 = vector.broadcast %c3_i32 : i32 to vector<16x128xi32>
    %298 = arith.addi %296, %297 : vector<16x128xi32>
    %299 = vector.broadcast %2 : i32 to vector<16x128xi32>
    %300 = arith.xori %298, %299 : vector<16x128xi32>
    %c16_i32_103 = arith.constant 16 : i32
    %301 = vector.broadcast %c16_i32_103 : i32 to vector<16x128xi32>
    %302 = arith.shrui %300, %301 : vector<16x128xi32>
    %303 = arith.xori %300, %302 : vector<16x128xi32>
    %c-2048144789_i32_104 = arith.constant -2048144789 : i32
    %304 = vector.broadcast %c-2048144789_i32_104 : i32 to vector<16x128xi32>
    %305 = arith.muli %303, %304 : vector<16x128xi32>
    %c13_i32_105 = arith.constant 13 : i32
    %306 = vector.broadcast %c13_i32_105 : i32 to vector<16x128xi32>
    %307 = arith.shrui %305, %306 : vector<16x128xi32>
    %308 = arith.xori %305, %307 : vector<16x128xi32>
    %c-1028477387_i32_106 = arith.constant -1028477387 : i32
    %309 = vector.broadcast %c-1028477387_i32_106 : i32 to vector<16x128xi32>
    %310 = arith.muli %308, %309 : vector<16x128xi32>
    %c16_i32_107 = arith.constant 16 : i32
    %311 = vector.broadcast %c16_i32_107 : i32 to vector<16x128xi32>
    %312 = arith.shrui %310, %311 : vector<16x128xi32>
    %313 = arith.xori %310, %312 : vector<16x128xi32>
    %c429496730_i32_108 = arith.constant 429496730 : i32
    %314 = vector.broadcast %c429496730_i32_108 : i32 to vector<16x128xi32>
    %315 = arith.cmpi uge, %313, %314 : vector<16x128xi32>
    %cst_109 = arith.constant 1.11111116 : f32
    %316 = vector.broadcast %cst_109 : f32 to vector<16x128xf32>
    %317 = arith.mulf %294, %316 : vector<16x128xf32>
    %cst_110 = arith.constant 0.000000e+00 : f32
    %318 = vector.broadcast %cst_110 : f32 to vector<16x128xf32>
    %319 = arith.select %315, %317, %318 : vector<16x128xi1>, vector<16x128xf32>
    %cst_111 = arith.constant 0.000000e+00 : f32
    %320 = vector.broadcast %cst_111 : f32 to vector<16x128xf32>
    %321 = arith.maximumf %319, %320 : vector<16x128xf32>
    %322 = vector.broadcast %46 : f32 to vector<16x128xf32>
    %323 = arith.mulf %321, %322 : vector<16x128xf32>
    %324 = arith.addf %258, %323 : vector<16x128xf32>
    %325 = vector.extract_strided_slice %52 {offsets = [0, 0, 0], sizes = [1, 16, 128], strides = [1, 1, 1]} : vector<7x16x128xf32> to vector<1x16x128xf32>
    %326 = vector.shape_cast %325 : vector<1x16x128xf32> to vector<16x128xf32>
    %327 = vector.broadcast %31 : f32 to vector<16x128xf32>
    %328 = arith.mulf %326, %327 : vector<16x128xf32>
    %329 = vector.broadcast %42 : f32 to vector<16x128xf32>
    %330 = arith.addf %328, %329 : vector<16x128xf32>
    %331 = vector.extract_strided_slice %52 {offsets = [1, 0, 0], sizes = [1, 16, 128], strides = [1, 1, 1]} : vector<7x16x128xf32> to vector<1x16x128xf32>
    %332 = vector.shape_cast %331 : vector<1x16x128xf32> to vector<16x128xf32>
    %333 = vector.broadcast %32 : f32 to vector<16x128xf32>
    %334 = arith.mulf %332, %333 : vector<16x128xf32>
    %335 = arith.addf %330, %334 : vector<16x128xf32>
    %336 = vector.extract_strided_slice %52 {offsets = [2, 0, 0], sizes = [1, 16, 128], strides = [1, 1, 1]} : vector<7x16x128xf32> to vector<1x16x128xf32>
    %337 = vector.shape_cast %336 : vector<1x16x128xf32> to vector<16x128xf32>
    %338 = vector.broadcast %33 : f32 to vector<16x128xf32>
    %339 = arith.mulf %337, %338 : vector<16x128xf32>
    %340 = arith.addf %335, %339 : vector<16x128xf32>
    %341 = vector.extract_strided_slice %52 {offsets = [3, 0, 0], sizes = [1, 16, 128], strides = [1, 1, 1]} : vector<7x16x128xf32> to vector<1x16x128xf32>
    %342 = vector.shape_cast %341 : vector<1x16x128xf32> to vector<16x128xf32>
    %343 = vector.broadcast %34 : f32 to vector<16x128xf32>
    %344 = arith.mulf %342, %343 : vector<16x128xf32>
    %345 = arith.addf %340, %344 : vector<16x128xf32>
    %346 = vector.extract_strided_slice %52 {offsets = [4, 0, 0], sizes = [1, 16, 128], strides = [1, 1, 1]} : vector<7x16x128xf32> to vector<1x16x128xf32>
    %347 = vector.shape_cast %346 : vector<1x16x128xf32> to vector<16x128xf32>
    %348 = vector.broadcast %35 : f32 to vector<16x128xf32>
    %349 = arith.mulf %347, %348 : vector<16x128xf32>
    %350 = arith.addf %345, %349 : vector<16x128xf32>
    %351 = vector.extract_strided_slice %52 {offsets = [5, 0, 0], sizes = [1, 16, 128], strides = [1, 1, 1]} : vector<7x16x128xf32> to vector<1x16x128xf32>
    %352 = vector.shape_cast %351 : vector<1x16x128xf32> to vector<16x128xf32>
    %353 = vector.broadcast %36 : f32 to vector<16x128xf32>
    %354 = arith.mulf %352, %353 : vector<16x128xf32>
    %355 = arith.addf %350, %354 : vector<16x128xf32>
    %356 = vector.extract_strided_slice %52 {offsets = [6, 0, 0], sizes = [1, 16, 128], strides = [1, 1, 1]} : vector<7x16x128xf32> to vector<1x16x128xf32>
    %357 = vector.shape_cast %356 : vector<1x16x128xf32> to vector<16x128xf32>
    %358 = vector.broadcast %37 : f32 to vector<16x128xf32>
    %359 = arith.mulf %357, %358 : vector<16x128xf32>
    %360 = arith.addf %355, %359 : vector<16x128xf32>
    %c5_i32_112 = arith.constant 5 : i32
    %361 = vector.broadcast %c5_i32_112 : i32 to vector<16x128xi32>
    %362 = arith.muli %61, %361 : vector<16x128xi32>
    %c4_i32 = arith.constant 4 : i32
    %363 = vector.broadcast %c4_i32 : i32 to vector<16x128xi32>
    %364 = arith.addi %362, %363 : vector<16x128xi32>
    %365 = vector.broadcast %2 : i32 to vector<16x128xi32>
    %366 = arith.xori %364, %365 : vector<16x128xi32>
    %c16_i32_113 = arith.constant 16 : i32
    %367 = vector.broadcast %c16_i32_113 : i32 to vector<16x128xi32>
    %368 = arith.shrui %366, %367 : vector<16x128xi32>
    %369 = arith.xori %366, %368 : vector<16x128xi32>
    %c-2048144789_i32_114 = arith.constant -2048144789 : i32
    %370 = vector.broadcast %c-2048144789_i32_114 : i32 to vector<16x128xi32>
    %371 = arith.muli %369, %370 : vector<16x128xi32>
    %c13_i32_115 = arith.constant 13 : i32
    %372 = vector.broadcast %c13_i32_115 : i32 to vector<16x128xi32>
    %373 = arith.shrui %371, %372 : vector<16x128xi32>
    %374 = arith.xori %371, %373 : vector<16x128xi32>
    %c-1028477387_i32_116 = arith.constant -1028477387 : i32
    %375 = vector.broadcast %c-1028477387_i32_116 : i32 to vector<16x128xi32>
    %376 = arith.muli %374, %375 : vector<16x128xi32>
    %c16_i32_117 = arith.constant 16 : i32
    %377 = vector.broadcast %c16_i32_117 : i32 to vector<16x128xi32>
    %378 = arith.shrui %376, %377 : vector<16x128xi32>
    %379 = arith.xori %376, %378 : vector<16x128xi32>
    %c429496730_i32_118 = arith.constant 429496730 : i32
    %380 = vector.broadcast %c429496730_i32_118 : i32 to vector<16x128xi32>
    %381 = arith.cmpi uge, %379, %380 : vector<16x128xi32>
    %cst_119 = arith.constant 1.11111116 : f32
    %382 = vector.broadcast %cst_119 : f32 to vector<16x128xf32>
    %383 = arith.mulf %360, %382 : vector<16x128xf32>
    %cst_120 = arith.constant 0.000000e+00 : f32
    %384 = vector.broadcast %cst_120 : f32 to vector<16x128xf32>
    %385 = arith.select %381, %383, %384 : vector<16x128xi1>, vector<16x128xf32>
    %cst_121 = arith.constant 0.000000e+00 : f32
    %386 = vector.broadcast %cst_121 : f32 to vector<16x128xf32>
    %387 = arith.maximumf %385, %386 : vector<16x128xf32>
    %388 = vector.broadcast %47 : f32 to vector<16x128xf32>
    %389 = arith.mulf %387, %388 : vector<16x128xf32>
    %390 = arith.addf %324, %389 : vector<16x128xf32>
    %391 = vector.broadcast %48 : f32 to vector<16x128xf32>
    %392 = arith.addf %390, %391 : vector<16x128xf32>
    %cst_122 = arith.constant 0.000000e+00 : f32
    %393 = vector.broadcast %cst_122 : f32 to vector<16x128xf32>
    %394 = arith.subf %393, %392 : vector<16x128xf32>
    %395 = math.exp %394 : vector<16x128xf32>
    %cst_123 = arith.constant 1.000000e+00 : f32
    %396 = vector.broadcast %cst_123 : f32 to vector<16x128xf32>
    %397 = arith.addf %396, %395 : vector<16x128xf32>
    %cst_124 = arith.constant 1.000000e+00 : f32
    %398 = vector.broadcast %cst_124 : f32 to vector<16x128xf32>
    %399 = arith.divf %398, %397 : vector<16x128xf32>
    %c0_125 = arith.constant 0 : index
    %400 = arith.index_cast %50 : i32 to index
    %c0_126 = arith.constant 0 : index
    %401 = vector.load %arg7[%c0_125, %400, %c0_126] : memref<1x16x128xf32, #tpu.memory_space<vmem>>, vector<1x16x128xf32>
    %402 = vector.shape_cast %401 : vector<1x16x128xf32> to vector<16x128xf32>
    %403 = vector.shape_cast %399 : vector<16x128xf32> to vector<1x16x128xf32>
    tpu.vector_store %arg7[%c0_125, %400, %c0_126], %403 {strides = array<i32>} : memref<1x16x128xf32, #tpu.memory_space<vmem>>, vector<1x16x128xf32>,
    %c1_i32_127 = arith.constant 1 : i32
    return
  }
  func.func @transform_0(%arg0: i32) -> i32 {
    %c0_i32 = arith.constant 0 : i32
    %c0_i32_0 = arith.constant 0 : i32
    return %c0_i32 : i32
  }
  func.func @transform_1(%arg0: i32) -> (i32, i32) {
    %c0_i32 = arith.constant 0 : i32
    %c0_i32_0 = arith.constant 0 : i32
    %c0_i32_1 = arith.constant 0 : i32
    return %c0_i32, %c0_i32_0 : i32, i32
  }
  func.func @transform_2(%arg0: i32) -> i32 {
    %c0_i32 = arith.constant 0 : i32
    %c0_i32_0 = arith.constant 0 : i32
    return %c0_i32 : i32
  }
  func.func @transform_3(%arg0: i32) -> i32 {
    %c0_i32 = arith.constant 0 : i32
    %c0_i32_0 = arith.constant 0 : i32
    return %c0_i32 : i32
  }
  func.func @transform_4(%arg0: i32) -> i32 {
    %c0_i32 = arith.constant 0 : i32
    %c0_i32_0 = arith.constant 0 : i32
    return %c0_i32 : i32
  }
  func.func @transform_5(%arg0: i32) -> (i32, i32, i32) {
    %c0_i32 = arith.constant 0 : i32
    %c0_i32_0 = arith.constant 0 : i32
    %c0_i32_1 = arith.constant 0 : i32
    return %c0_i32, %arg0, %c0_i32_0 : i32, i32, i32
  }
  func.func @transform_6(%arg0: i32) -> (i32, i32, i32) {
    %c0_i32 = arith.constant 0 : i32
    %c0_i32_0 = arith.constant 0 : i32
    %c0_i32_1 = arith.constant 0 : i32
    return %c0_i32, %arg0, %c0_i32_0 : i32, i32, i32
  }
}

</mosaic_0001>

<llo_original>
// kernel: tpu_custom_call.1
$region0: #{tpu_custom_call.1}
  #allocation0 [shape = 'u32[]', space=smem, size = 0x4, offset = 0x4, fixed_abs, tag = 'smem constant byte address 0x4 - core index']
  #allocation1 [shape = 'u32[144,128]{1,0:T(1,128)}', space=vmem, size = 0x12000, scoped, tag = 'internal scratch']
  #allocation2 [shape = 's32[1]{0:T(128)S(6)}', space=smem, size = 0x200, scoped, tag = 'scoped memory for tpu_custom_call.1']
  #allocation3 [shape = 'f32[1]{0:T(128)S(6)}', space=smem, size = 0x200, scoped, tag = 'scoped memory for tpu_custom_call.1']
  %s0 = inlined_call_operand.<no memory space> [shape: s32[1], index: 0, kind: input, shape index: {}]
  %s1 = inlined_call_operand.hbm [shape: f32[5,7], index: 1, kind: input, shape index: {}]
  %s2 = inlined_call_operand.vmem [shape: f32[5], index: 2, kind: input, shape index: {}]
  %s3 = inlined_call_operand.vmem [shape: f32[5], index: 3, kind: input, shape index: {}]
  %s4 = inlined_call_operand.<no memory space> [shape: f32[1], index: 4, kind: input, shape index: {}]
  %s5 = inlined_call_operand.hbm [shape: f32[7,16,128], index: 5, kind: input, shape index: {}]
  %s6 = inlined_call_operand.hbm [shape: f32[1,16,128], index: 6, kind: output, shape index: {}]
  %s7 = sld [smem:[#allocation0]]
  $region50: #{tpu_custom_call.1} parent=0
    _
  %s9 = ssub.s32 1, %s7
  %s10 = scalar_select 0, %s9, %s7
  %11 = sst [smem:[#allocation2]] %s0
  %12 = sst [smem:[#allocation3]] %s4
  $region1: #{tpu_custom_call.1} parent=0
    #allocation4 [shape = 'u8[4096]{0}', space=smem, size = 0x1000, scoped, tag = 'input window, operand 1, single buffered']
    #allocation5 [shape = 's32[1]{0}', space=sflag, size = 0x4, scoped, tag = 'scoped memory for tpu_custom_call.1']
    #allocation6 [shape = 's32[1]{0}', space=sflag, size = 0x4, scoped, tag = 'scoped memory for tpu_custom_call.1']
    #allocation7 [shape = 's32[1]{0}', space=sflag, size = 0x4, scoped, tag = 'scoped memory for tpu_custom_call.1']
    #allocation8 [shape = 's32[1]{0}', space=sflag, size = 0x4, scoped, tag = 'scoped memory for tpu_custom_call.1']
    #allocation9 [shape = 'u8[512]{0}', space=smem, size = 0x200, scoped, tag = 'input window, operand 2, single buffered']
    #allocation10 [shape = 'u8[512]{0}', space=smem, size = 0x200, scoped, tag = 'input window, operand 3, single buffered']
    #allocation11 [shape = 's32[1]{0}', space=sflag, size = 0x4, scoped, tag = 'scoped memory for tpu_custom_call.1']
    #allocation12 [shape = 'u8[57344]{0}', space=vmem, size = 0xe000, scoped, tag = 'input window, operand 5, single buffered']
    #allocation13 [shape = 'u8[8192]{0}', space=vmem, size = 0x2000, scoped, tag = 'output window, operand 0, single buffered']
    %13 = vsyncpa [#allocation7], 0
    %14 = vsyncpa [#allocation8], 0
    %15 = vsyncpa [#allocation11], 0
    %16 = vsyncpa [#allocation5], 0
    %17 = vsyncpa [#allocation6], 0
    // Predicated region
    $region2: #{tpu_custom_call.1} parent=1 // pred_check
      _
    $region3: #{tpu_custom_call.1} parent=1 // pred_check_branch
      %19 = sbr.rel (0) target = $region5
    $region4: #{tpu_custom_call.1} parent=1 // pred_region
      _
    $region5: #{tpu_custom_call.1} parent=1 // pred_fallthru
      _
    // Predicated region
    $region6: #{tpu_custom_call.1} parent=1 // pred_check
      _
    $region7: #{tpu_custom_call.1} parent=1 // pred_check_branch
      %21 = sbr.rel (0) target = $region9
    $region8: #{tpu_custom_call.1} parent=1 // pred_region
      %s23 = ssub.s32 128, 128
      %24 = vsyncadd [#allocation7], %s23
      %27 = dma.hbm_to_smem %s1, 128, [#allocation4], [#allocation7]
    $region9: #{tpu_custom_call.1} parent=1 // pred_fallthru
      _
    // Predicated region
    $region10: #{tpu_custom_call.1} parent=1 // pred_check
      _
    $region11: #{tpu_custom_call.1} parent=1 // pred_check_branch
      %29 = sbr.rel (0) target = $region13
    $region12: #{tpu_custom_call.1} parent=1 // pred_region
      %s31 = ssub.s32 16, 16
      %32 = vsyncadd [#allocation8], %s31
      %s34 = sshll.u32 %s2, 4
      %s35 = int_to_ptr.vmem [resolvable:$true] %s34
      %37 = dma.vmem_to_smem %s35, 16, [#allocation9], [#allocation8]
    $region13: #{tpu_custom_call.1} parent=1 // pred_fallthru
      _
    // Predicated region
    $region14: #{tpu_custom_call.1} parent=1 // pred_check
      _
    $region15: #{tpu_custom_call.1} parent=1 // pred_check_branch
      %39 = sbr.rel (0) target = $region17
    $region16: #{tpu_custom_call.1} parent=1 // pred_region
      %s41 = ssub.s32 16, 16
      %42 = vsyncadd [#allocation11], %s41
      %s44 = sshll.u32 %s3, 4
      %s45 = int_to_ptr.vmem [resolvable:$true] %s44
      %47 = dma.vmem_to_smem %s45, 16, [#allocation10], [#allocation11]
    $region17: #{tpu_custom_call.1} parent=1 // pred_fallthru
      _
    // Predicated region
    $region18: #{tpu_custom_call.1} parent=1 // pred_check
      _
    $region19: #{tpu_custom_call.1} parent=1 // pred_check_branch
      %49 = sbr.rel (0) target = $region21
    $region20: #{tpu_custom_call.1} parent=1 // pred_region
      _
    $region21: #{tpu_custom_call.1} parent=1 // pred_fallthru
      _
    // Predicated region
    $region22: #{tpu_custom_call.1} parent=1 // pred_check
      _
    $region23: #{tpu_custom_call.1} parent=1 // pred_check_branch
      %51 = sbr.rel (0) target = $region25
    $region24: #{tpu_custom_call.1} parent=1 // pred_region
      %s53 = ssub.s32 1792, 1792
      %54 = vsyncadd [#allocation5], %s53
      %s55 = sshll.u32 [#allocation12], 4
      %s56 = int_to_ptr.vmem [resolvable:$true] %s55
      %61 = dma.hbm_to_vmem [thread:$0]  %s5, 1792, %s56, [#allocation5], 128, 128, 8
    $region25: #{tpu_custom_call.1} parent=1 // pred_fallthru
      _
    // Predicated region
    $region26: #{tpu_custom_call.1} parent=1 // pred_check
      _
    $region27: #{tpu_custom_call.1} parent=1 // pred_check_branch
      %63 = sbr.rel (0) target = $region29
    $region28: #{tpu_custom_call.1} parent=1 // pred_region
      %64 = dma.done [#allocation7], 128
    $region29: #{tpu_custom_call.1} parent=1 // pred_fallthru
      _
    // Predicated region
    $region30: #{tpu_custom_call.1} parent=1 // pred_check
      _
    $region31: #{tpu_custom_call.1} parent=1 // pred_check_branch
      %66 = sbr.rel (0) target = $region33
    $region32: #{tpu_custom_call.1} parent=1 // pred_region
      %67 = dma.done [#allocation8], 16
    $region33: #{tpu_custom_call.1} parent=1 // pred_fallthru
      _
    // Predicated region
    $region34: #{tpu_custom_call.1} parent=1 // pred_check
      _
    $region35: #{tpu_custom_call.1} parent=1 // pred_check_branch
      %69 = sbr.rel (0) target = $region37
    $region36: #{tpu_custom_call.1} parent=1 // pred_region
      %70 = dma.done [#allocation11], 16
    $region37: #{tpu_custom_call.1} parent=1 // pred_fallthru
      _
    // Predicated region
    $region38: #{tpu_custom_call.1} parent=1 // pred_check
      _
    $region39: #{tpu_custom_call.1} parent=1 // pred_check_branch
      %72 = sbr.rel (0) target = $region41
    $region40: #{tpu_custom_call.1} parent=1 // pred_region
      %73 = dma.done [#allocation5], 1792
    $region41: #{tpu_custom_call.1} parent=1 // pred_fallthru
      _
    %74 = sfence
    %s75 = smul.u32 0, 2048
    %s76 = sld [smem:[#allocation2]]
    %s77 = smul.u32 %s76, 2654435769
    %s78 = sld [smem:[#allocation4]]
    %s79 = sld [smem:[#allocation4 + $0x1]]
    %s80 = sld [smem:[#allocation4 + $0x2]]
    %s81 = sld [smem:[#allocation4 + $0x3]]
    %s82 = sld [smem:[#allocation4 + $0x4]]
    %s83 = sld [smem:[#allocation4 + $0x5]]
    %s84 = sld [smem:[#allocation4 + $0x6]]
    %s85 = sld [smem:[#allocation4 + $0x80]]
    %s86 = sld [smem:[#allocation4 + $0x81]]
    %s87 = sld [smem:[#allocation4 + $0x82]]
    %s88 = sld [smem:[#allocation4 + $0x83]]
    %s89 = sld [smem:[#allocation4 + $0x84]]
    %s90 = sld [smem:[#allocation4 + $0x85]]
    %s91 = sld [smem:[#allocation4 + $0x86]]
    %s92 = sld [smem:[#allocation4 + $0x100]]
    %s93 = sld [smem:[#allocation4 + $0x101]]
    %s94 = sld [smem:[#allocation4 + $0x102]]
    %s95 = sld [smem:[#allocation4 + $0x103]]
    %s96 = sld [smem:[#allocation4 + $0x104]]
    %s97 = sld [smem:[#allocation4 + $0x105]]
    %s98 = sld [smem:[#allocation4 + $0x106]]
    %s99 = sld [smem:[#allocation4 + $0x180]]
    %s100 = sld [smem:[#allocation4 + $0x181]]
    %s101 = sld [smem:[#allocation4 + $0x182]]
    %s102 = sld [smem:[#allocation4 + $0x183]]
    %s103 = sld [smem:[#allocation4 + $0x184]]
    %s104 = sld [smem:[#allocation4 + $0x185]]
    %s105 = sld [smem:[#allocation4 + $0x186]]
    %s106 = sld [smem:[#allocation4 + $0x200]]
    %s107 = sld [smem:[#allocation4 + $0x201]]
    %s108 = sld [smem:[#allocation4 + $0x202]]
    %s109 = sld [smem:[#allocation4 + $0x203]]
    %s110 = sld [smem:[#allocation4 + $0x204]]
    %s111 = sld [smem:[#allocation4 + $0x205]]
    %s112 = sld [smem:[#allocation4 + $0x206]]
    %s113 = sld [smem:[#allocation9]]
    %s114 = sld [smem:[#allocation9 + $0x1]]
    %s115 = sld [smem:[#allocation9 + $0x2]]
    %s116 = sld [smem:[#allocation9 + $0x3]]
    %s117 = sld [smem:[#allocation9 + $0x4]]
    %s118 = sld [smem:[#allocation10]]
    %s119 = sld [smem:[#allocation10 + $0x1]]
    %s120 = sld [smem:[#allocation10 + $0x2]]
    %s121 = sld [smem:[#allocation10 + $0x3]]
    %s122 = sld [smem:[#allocation10 + $0x4]]
    %s123 = sld [smem:[#allocation3]]
    %v124 = vld [vmem:[#allocation12] sm:$0xff]
    %v125 = vld [vmem:[#allocation12 + $0x8] sm:$0xff]
    %v126 = vld [vmem:[#allocation12 + $0x10] sm:$0xff]
    %v127 = vld [vmem:[#allocation12 + $0x18] sm:$0xff]
    %v128 = vld [vmem:[#allocation12 + $0x20] sm:$0xff]
    %v129 = vld [vmem:[#allocation12 + $0x28] sm:$0xff]
    %v130 = vld [vmem:[#allocation12 + $0x30] sm:$0xff]
    %v131 = vld [vmem:[#allocation12 + $0x38] sm:$0xff]
    %v132 = vld [vmem:[#allocation12 + $0x40] sm:$0xff]
    %v133 = vld [vmem:[#allocation12 + $0x48] sm:$0xff]
    %v134 = vld [vmem:[#allocation12 + $0x50] sm:$0xff]
    %v135 = vld [vmem:[#allocation12 + $0x58] sm:$0xff]
    %v136 = vld [vmem:[#allocation12 + $0x60] sm:$0xff]
    %v137 = vld [vmem:[#allocation12 + $0x68] sm:$0xff]
    %v138 = vlaneseq
    %v139 = vshrl.u32 %v138, 7
    %v140 = vadd.s32 %v139, 8
    %v141 = vlaneseq
    %v142 = vand.u32 %v141, 127
    %v143 = vstv 0
    %v144 = vadd.s32 %v143, %v139
    %v145 = vadd.s32 %v143, %v140
    %v146 = vmul.u32 %v144, 128
    %v147 = vmul.u32 %v145, 128
    %v148 = vstv %s75
    %v149 = vadd.s32 %v148, %v146
    %v150 = vadd.s32 %v148, %v147
    %v151 = vadd.s32 %v149, %v142
    %v152 = vadd.s32 %v150, %v142
    %v153 = vstv %s78
    %v154 = vmul.f32 %v124, %v153
    %v155 = vmul.f32 %v125, %v153
    %v156 = vstv %s113
    %v157 = vadd.f32 %v154, %v156
    %v158 = vadd.f32 %v155, %v156
    %v159 = vstv %s79
    %v160 = vmul.f32 %v126, %v159
    %v161 = vmul.f32 %v127, %v159
    %v162 = vadd.f32 %v157, %v160
    %v163 = vadd.f32 %v158, %v161
    %v164 = vstv %s80
    %v165 = vmul.f32 %v128, %v164
    %v166 = vmul.f32 %v129, %v164
    %v167 = vadd.f32 %v162, %v165
    %v168 = vadd.f32 %v163, %v166
    %v169 = vstv %s81
    %v170 = vmul.f32 %v130, %v169
    %v171 = vmul.f32 %v131, %v169
    %v172 = vadd.f32 %v167, %v170
    %v173 = vadd.f32 %v168, %v171
    %v174 = vstv %s82
    %v175 = vmul.f32 %v132, %v174
    %v176 = vmul.f32 %v133, %v174
    %v177 = vadd.f32 %v172, %v175
    %v178 = vadd.f32 %v173, %v176
    %v179 = vstv %s83
    %v180 = vmul.f32 %v134, %v179
    %v181 = vmul.f32 %v135, %v179
    %v182 = vadd.f32 %v177, %v180
    %v183 = vadd.f32 %v178, %v181
    %v184 = vstv %s84
    %v185 = vmul.f32 %v136, %v184
    %v186 = vmul.f32 %v137, %v184
    %v187 = vadd.f32 %v182, %v185
    %v188 = vadd.f32 %v183, %v186
    %v189 = vmul.u32 %v151, 5
    %v190 = vmul.u32 %v152, 5
    %v191 = vstv %s77
    %v192 = vxor.u32 %v189, %v191
    %v193 = vxor.u32 %v190, %v191
    %v194 = vshrl.u32 %v192, 16
    %v195 = vshrl.u32 %v193, 16
    %v196 = vxor.u32 %v192, %v194
    %v197 = vxor.u32 %v193, %v195
    %v198 = vmul.u32 %v196, 2246822507
    %v199 = vmul.u32 %v197, 2246822507
    %v200 = vshrl.u32 %v198, 13
    %v201 = vshrl.u32 %v199, 13
    %v202 = vxor.u32 %v198, %v200
    %v203 = vxor.u32 %v199, %v201
    %v204 = vmul.u32 %v202, 3266489909
    %v205 = vmul.u32 %v203, 3266489909
    %v206 = vshrl.u32 %v204, 16
    %v207 = vshrl.u32 %v205, 16
    %v208 = vxor.u32 %v204, %v206
    %v209 = vxor.u32 %v205, %v207
    %vm210 = vcmp.ge.u32.totalorder %v208, 429496730
    %vm211 = vcmp.ge.u32.totalorder %v209, 429496730
    %v212 = vmul.f32 %v187, 1.1111112
    %v213 = vmul.f32 %v188, 1.1111112
    %v214 = vsel %vm210, %v212, 0.0
    %v215 = vsel %vm211, %v213, 0.0
    %v216 = vmax.f32 %v214, 0.0
    %v217 = vmax.f32 %v215, 0.0
    %v218 = vstv %s118
    %v219 = vmul.f32 %v216, %v218
    %v220 = vmul.f32 %v217, %v218
    %v221 = vstv %s85
    %v222 = vmul.f32 %v124, %v221
    %v223 = vmul.f32 %v125, %v221
    %v224 = vstv %s114
    %v225 = vadd.f32 %v222, %v224
    %v226 = vadd.f32 %v223, %v224
    %v227 = vstv %s86
    %v228 = vmul.f32 %v126, %v227
    %v229 = vmul.f32 %v127, %v227
    %v230 = vadd.f32 %v225, %v228
    %v231 = vadd.f32 %v226, %v229
    %v232 = vstv %s87
    %v233 = vmul.f32 %v128, %v232
    %v234 = vmul.f32 %v129, %v232
    %v235 = vadd.f32 %v230, %v233
    %v236 = vadd.f32 %v231, %v234
    %v237 = vstv %s88
    %v238 = vmul.f32 %v130, %v237
    %v239 = vmul.f32 %v131, %v237
    %v240 = vadd.f32 %v235, %v238
    %v241 = vadd.f32 %v236, %v239
    %v242 = vstv %s89
    %v243 = vmul.f32 %v132, %v242
    %v244 = vmul.f32 %v133, %v242
    %v245 = vadd.f32 %v240, %v243
    %v246 = vadd.f32 %v241, %v244
    %v247 = vstv %s90
    %v248 = vmul.f32 %v134, %v247
    %v249 = vmul.f32 %v135, %v247
    %v250 = vadd.f32 %v245, %v248
    %v251 = vadd.f32 %v246, %v249
    %v252 = vstv %s91
    %v253 = vmul.f32 %v136, %v252
    %v254 = vmul.f32 %v137, %v252
    %v255 = vadd.f32 %v250, %v253
    %v256 = vadd.f32 %v251, %v254
    %v257 = vadd.s32 %v189, 1
    %v258 = vadd.s32 %v190, 1
    %v259 = vxor.u32 %v257, %v191
    %v260 = vxor.u32 %v258, %v191
    %v261 = vshrl.u32 %v259, 16
    %v262 = vshrl.u32 %v260, 16
    %v263 = vxor.u32 %v259, %v261
    %v264 = vxor.u32 %v260, %v262
    %v265 = vmul.u32 %v263, 2246822507
    %v266 = vmul.u32 %v264, 2246822507
    %v267 = vshrl.u32 %v265, 13
    %v268 = vshrl.u32 %v266, 13
    %v269 = vxor.u32 %v265, %v267
    %v270 = vxor.u32 %v266, %v268
    %v271 = vmul.u32 %v269, 3266489909
    %v272 = vmul.u32 %v270, 3266489909
    %v273 = vshrl.u32 %v271, 16
    %v274 = vshrl.u32 %v272, 16
    %v275 = vxor.u32 %v271, %v273
    %v276 = vxor.u32 %v272, %v274
    %vm277 = vcmp.ge.u32.totalorder %v275, 429496730
    %vm278 = vcmp.ge.u32.totalorder %v276, 429496730
    %v279 = vmul.f32 %v255, 1.1111112
    %v280 = vmul.f32 %v256, 1.1111112
    %v281 = vsel %vm277, %v279, 0.0
    %v282 = vsel %vm278, %v280, 0.0
    %v283 = vmax.f32 %v281, 0.0
    %v284 = vmax.f32 %v282, 0.0
    %v285 = vstv %s119
    %v286 = vmul.f32 %v283, %v285
    %v287 = vmul.f32 %v284, %v285
    %v288 = vadd.f32 %v219, %v286
    %v289 = vadd.f32 %v220, %v287
    %v290 = vstv %s92
    %v291 = vmul.f32 %v124, %v290
    %v292 = vmul.f32 %v125, %v290
    %v293 = vstv %s115
    %v294 = vadd.f32 %v291, %v293
    %v295 = vadd.f32 %v292, %v293
    %v296 = vstv %s93
    %v297 = vmul.f32 %v126, %v296
    %v298 = vmul.f32 %v127, %v296
    %v299 = vadd.f32 %v294, %v297
    %v300 = vadd.f32 %v295, %v298
    %v301 = vstv %s94
    %v302 = vmul.f32 %v128, %v301
    %v303 = vmul.f32 %v129, %v301
    %v304 = vadd.f32 %v299, %v302
    %v305 = vadd.f32 %v300, %v303
    %v306 = vstv %s95
    %v307 = vmul.f32 %v130, %v306
    %v308 = vmul.f32 %v131, %v306
    %v309 = vadd.f32 %v304, %v307
    %v310 = vadd.f32 %v305, %v308
    %v311 = vstv %s96
    %v312 = vmul.f32 %v132, %v311
    %v313 = vmul.f32 %v133, %v311
    %v314 = vadd.f32 %v309, %v312
    %v315 = vadd.f32 %v310, %v313
    %v316 = vstv %s97
    %v317 = vmul.f32 %v134, %v316
    %v318 = vmul.f32 %v135, %v316
    %v319 = vadd.f32 %v314, %v317
    %v320 = vadd.f32 %v315, %v318
    %v321 = vstv %s98
    %v322 = vmul.f32 %v136, %v321
    %v323 = vmul.f32 %v137, %v321
    %v324 = vadd.f32 %v319, %v322
    %v325 = vadd.f32 %v320, %v323
    %v326 = vadd.s32 %v189, 2
    %v327 = vadd.s32 %v190, 2
    %v328 = vxor.u32 %v326, %v191
    %v329 = vxor.u32 %v327, %v191
    %v330 = vshrl.u32 %v328, 16
    %v331 = vshrl.u32 %v329, 16
    %v332 = vxor.u32 %v328, %v330
    %v333 = vxor.u32 %v329, %v331
    %v334 = vmul.u32 %v332, 2246822507
    %v335 = vmul.u32 %v333, 2246822507
    %v336 = vshrl.u32 %v334, 13
    %v337 = vshrl.u32 %v335, 13
    %v338 = vxor.u32 %v334, %v336
    %v339 = vxor.u32 %v335, %v337
    %v340 = vmul.u32 %v338, 3266489909
    %v341 = vmul.u32 %v339, 3266489909
    %v342 = vshrl.u32 %v340, 16
    %v343 = vshrl.u32 %v341, 16
    %v344 = vxor.u32 %v340, %v342
    %v345 = vxor.u32 %v341, %v343
    %vm346 = vcmp.ge.u32.totalorder %v344, 429496730
    %vm347 = vcmp.ge.u32.totalorder %v345, 429496730
    %v348 = vmul.f32 %v324, 1.1111112
    %v349 = vmul.f32 %v325, 1.1111112
    %v350 = vsel %vm346, %v348, 0.0
    %v351 = vsel %vm347, %v349, 0.0
    %v352 = vmax.f32 %v350, 0.0
    %v353 = vmax.f32 %v351, 0.0
    %v354 = vstv %s120
    %v355 = vmul.f32 %v352, %v354
    %v356 = vmul.f32 %v353, %v354
    %v357 = vadd.f32 %v288, %v355
    %v358 = vadd.f32 %v289, %v356
    %v359 = vstv %s99
    %v360 = vmul.f32 %v124, %v359
    %v361 = vmul.f32 %v125, %v359
    %v362 = vstv %s116
    %v363 = vadd.f32 %v360, %v362
    %v364 = vadd.f32 %v361, %v362
    %v365 = vstv %s100
    %v366 = vmul.f32 %v126, %v365
    %v367 = vmul.f32 %v127, %v365
    %v368 = vadd.f32 %v363, %v366
    %v369 = vadd.f32 %v364, %v367
    %v370 = vstv %s101
    %v371 = vmul.f32 %v128, %v370
    %v372 = vmul.f32 %v129, %v370
    %v373 = vadd.f32 %v368, %v371
    %v374 = vadd.f32 %v369, %v372
    %v375 = vstv %s102
    %v376 = vmul.f32 %v130, %v375
    %v377 = vmul.f32 %v131, %v375
    %v378 = vadd.f32 %v373, %v376
    %v379 = vadd.f32 %v374, %v377
    %v380 = vstv %s103
    %v381 = vmul.f32 %v132, %v380
    %v382 = vmul.f32 %v133, %v380
    %v383 = vadd.f32 %v378, %v381
    %v384 = vadd.f32 %v379, %v382
    %v385 = vstv %s104
    %v386 = vmul.f32 %v134, %v385
    %v387 = vmul.f32 %v135, %v385
    %v388 = vadd.f32 %v383, %v386
    %v389 = vadd.f32 %v384, %v387
    %v390 = vstv %s105
    %v391 = vmul.f32 %v136, %v390
    %v392 = vmul.f32 %v137, %v390
    %v393 = vadd.f32 %v388, %v391
    %v394 = vadd.f32 %v389, %v392
    %v395 = vadd.s32 %v189, 3
    %v396 = vadd.s32 %v190, 3
    %v397 = vxor.u32 %v395, %v191
    %v398 = vxor.u32 %v396, %v191
    %v399 = vshrl.u32 %v397, 16
    %v400 = vshrl.u32 %v398, 16
    %v401 = vxor.u32 %v397, %v399
    %v402 = vxor.u32 %v398, %v400
    %v403 = vmul.u32 %v401, 2246822507
    %v404 = vmul.u32 %v402, 2246822507
    %v405 = vshrl.u32 %v403, 13
    %v406 = vshrl.u32 %v404, 13
    %v407 = vxor.u32 %v403, %v405
    %v408 = vxor.u32 %v404, %v406
    %v409 = vmul.u32 %v407, 3266489909
    %v410 = vmul.u32 %v408, 3266489909
    %v411 = vshrl.u32 %v409, 16
    %v412 = vshrl.u32 %v410, 16
    %v413 = vxor.u32 %v409, %v411
    %v414 = vxor.u32 %v410, %v412
    %vm415 = vcmp.ge.u32.totalorder %v413, 429496730
    %vm416 = vcmp.ge.u32.totalorder %v414, 429496730
    %v417 = vmul.f32 %v393, 1.1111112
    %v418 = vmul.f32 %v394, 1.1111112
    %v419 = vsel %vm415, %v417, 0.0
    %v420 = vsel %vm416, %v418, 0.0
    %v421 = vmax.f32 %v419, 0.0
    %v422 = vmax.f32 %v420, 0.0
    %v423 = vstv %s121
    %v424 = vmul.f32 %v421, %v423
    %v425 = vmul.f32 %v422, %v423
    %v426 = vadd.f32 %v357, %v424
    %v427 = vadd.f32 %v358, %v425
    %v428 = vstv %s106
    %v429 = vmul.f32 %v124, %v428
    %v430 = vmul.f32 %v125, %v428
    %v431 = vstv %s117
    %v432 = vadd.f32 %v429, %v431
    %v433 = vadd.f32 %v430, %v431
    %v434 = vstv %s107
    %v435 = vmul.f32 %v126, %v434
    %v436 = vmul.f32 %v127, %v434
    %v437 = vadd.f32 %v432, %v435
    %v438 = vadd.f32 %v433, %v436
    %v439 = vstv %s108
    %v440 = vmul.f32 %v128, %v439
    %v441 = vmul.f32 %v129, %v439
    %v442 = vadd.f32 %v437, %v440
    %v443 = vadd.f32 %v438, %v441
    %v444 = vstv %s109
    %v445 = vmul.f32 %v130, %v444
    %v446 = vmul.f32 %v131, %v444
    %v447 = vadd.f32 %v442, %v445
    %v448 = vadd.f32 %v443, %v446
    %v449 = vstv %s110
    %v450 = vmul.f32 %v132, %v449
    %v451 = vmul.f32 %v133, %v449
    %v452 = vadd.f32 %v447, %v450
    %v453 = vadd.f32 %v448, %v451
    %v454 = vstv %s111
    %v455 = vmul.f32 %v134, %v454
    %v456 = vmul.f32 %v135, %v454
    %v457 = vadd.f32 %v452, %v455
    %v458 = vadd.f32 %v453, %v456
    %v459 = vstv %s112
    %v460 = vmul.f32 %v136, %v459
    %v461 = vmul.f32 %v137, %v459
    %v462 = vadd.f32 %v457, %v460
    %v463 = vadd.f32 %v458, %v461
    %v464 = vadd.s32 %v189, 4
    %v465 = vadd.s32 %v190, 4
    %v466 = vxor.u32 %v464, %v191
    %v467 = vxor.u32 %v465, %v191
    %v468 = vshrl.u32 %v466, 16
    %v469 = vshrl.u32 %v467, 16
    %v470 = vxor.u32 %v466, %v468
    %v471 = vxor.u32 %v467, %v469
    %v472 = vmul.u32 %v470, 2246822507
    %v473 = vmul.u32 %v471, 2246822507
    %v474 = vshrl.u32 %v472, 13
    %v475 = vshrl.u32 %v473, 13
    %v476 = vxor.u32 %v472, %v474
    %v477 = vxor.u32 %v473, %v475
    %v478 = vmul.u32 %v476, 3266489909
    %v479 = vmul.u32 %v477, 3266489909
    %v480 = vshrl.u32 %v478, 16
    %v481 = vshrl.u32 %v479, 16
    %v482 = vxor.u32 %v478, %v480
    %v483 = vxor.u32 %v479, %v481
    %vm484 = vcmp.ge.u32.totalorder %v482, 429496730
    %vm485 = vcmp.ge.u32.totalorder %v483, 429496730
    %v486 = vmul.f32 %v462, 1.1111112
    %v487 = vmul.f32 %v463, 1.1111112
    %v488 = vsel %vm484, %v486, 0.0
    %v489 = vsel %vm485, %v487, 0.0
    %v490 = vmax.f32 %v488, 0.0
    %v491 = vmax.f32 %v489, 0.0
    %v492 = vstv %s122
    %v493 = vmul.f32 %v490, %v492
    %v494 = vmul.f32 %v491, %v492
    %v495 = vadd.f32 %v426, %v493
    %v496 = vadd.f32 %v427, %v494
    %v497 = vstv %s123
    %v498 = vadd.f32 %v495, %v497
    %v499 = vadd.f32 %v496, %v497
    %v500 = vsub.f32 0.0, %v498
    %v501 = vsub.f32 0.0, %v499
    %v502 = vmul.f32 %v500, 1.442695
    %v503 = vpow.pop %v502
    %v504 = vmul.f32 %v501, 1.442695
    %v505 = vpow.pop %v504
    %v506 = vadd.f32 %v503, 1.0
    %v507 = vadd.f32 %v505, 1.0
    %v508 = vrcp.pop %v506
    %v509 = vmul.f32 1.0, %v508
    %v510 = vrcp.pop %v507
    %v511 = vmul.f32 1.0, %v510
    %512 = vst [vmem:[#allocation13] sm:$0xff] %v509
    %513 = vst [vmem:[#allocation13 + $0x8] sm:$0xff] %v511
    // Predicated region
    $region42: #{tpu_custom_call.1} parent=1 // pred_check
      _
    $region43: #{tpu_custom_call.1} parent=1 // pred_check_branch
      %515 = sbr.rel (0) target = $region45
    $region44: #{tpu_custom_call.1} parent=1 // pred_region
      %s517 = ssub.s32 256, 256
      %518 = vsyncadd [#allocation6], %s517
      %s519 = sshll.u32 [#allocation13], 4
      %s520 = int_to_ptr.vmem [resolvable:$true] %s519
      %525 = dma.vmem_to_hbm [thread:$0]  %s520, 256, %s6, [#allocation6], 128, 128, 8
    $region45: #{tpu_custom_call.1} parent=1 // pred_fallthru
      _
    // Predicated region
    $region46: #{tpu_custom_call.1} parent=1 // pred_check
      _
    $region47: #{tpu_custom_call.1} parent=1 // pred_check_branch
      %527 = sbr.rel (0) target = $region49
    $region48: #{tpu_custom_call.1} parent=1 // pred_region
      %528 = dma.done [#allocation6], 256
    $region49: #{tpu_custom_call.1} parent=1 // pred_fallthru
      _
    %529 = vsyncpa [#allocation5], 1
    %530 = vsyncpa [#allocation6], 1
    %531 = vsyncpa [#allocation7], 1
    %532 = vsyncpa [#allocation8], 1
    %533 = vsyncpa [#allocation11], 1

</llo_original>
